<compile_context>
chip_gen: v7x
topology: tpu7x:2x2x1
jax: 0.10.0
libtpu: 0.0.40
codegen_flags: <defaults>
</compile_context>

<pallas_src>
import functools

import jax
import jax.numpy as jnp
from jax.experimental import pallas as pl
from jax.experimental.pallas import tpu as pltpu


# ---------------------------------------------------------------------------
# Fused kernel
# ---------------------------------------------------------------------------
def _gelu_tanh(x):
    c = 0.7978845608028654  # sqrt(2/pi)
    return 0.5 * x * (1.0 + jnp.tanh(c * (x + 0.044715 * x * x * x)))


def _mamba_block_kernel(x_ref, g_ref, beta_ref, w1_ref, b1_ref, w2_ref, b2_ref,
                        o_ref, *, eps, sub, n_sub):
    # x_ref / o_ref: (C, TL) — channels on sublanes, spatial positions on lanes.
    g = g_ref[...]        # (C, 1) f32  — LayerNorm #1 gamma
    bt = beta_ref[...]    # (C, 1) f32  — LayerNorm #1 beta
    w1 = w1_ref[...]      # (D, C) bf16 — LayerNorm #2 affine pre-folded in
    b1 = b1_ref[...]      # (D, 1) f32
    w2 = w2_ref[...]      # (C, D) bf16
    b2 = b2_ref[...]      # (C, 1) f32
    inv_c = 1.0 / x_ref.shape[0]

    def body(i, carry):
        # Lane sub-chunk: bounds vreg pressure (h is (D, sub) f32) at large TL.
        start = pl.multiple_of(i * sub, 128)
        x = x_ref[:, pl.ds(start, sub)].astype(jnp.float32)   # (C, sub)

        # --- LayerNorm #1 over channels, one-pass E[x^2]-E[x]^2, rsqrt on EUP ---
        mu = jnp.sum(x, axis=0, keepdims=True) * inv_c
        ex2 = jnp.sum(x * x, axis=0, keepdims=True) * inv_c
        var = ex2 - mu * mu
        xn = (x - mu) * jax.lax.rsqrt(var + eps) * g + bt

        # --- Mamba SSM (identity, see TODO) + residual ---
        xm = xn + x

        # --- LayerNorm #2 (affine folded into w1/b1 at prep time) ---
        mu2 = jnp.sum(xm, axis=0, keepdims=True) * inv_c
        ex2b = jnp.sum(xm * xm, axis=0, keepdims=True) * inv_c
        var2 = ex2b - mu2 * mu2
        xh = (xm - mu2) * jax.lax.rsqrt(var2 + eps)

        # --- proj: Linear(C->D) -> GELU -> Linear(D->C), lanes stay L ---
        h = jnp.dot(w1, xh.astype(jnp.bfloat16),
                    preferred_element_type=jnp.float32) + b1
        h = _gelu_tanh(h)
        y = jnp.dot(w2, h.astype(jnp.bfloat16),
                    preferred_element_type=jnp.float32) + b2
        o_ref[:, pl.ds(start, sub)] = y.astype(o_ref.dtype)
        return carry

    jax.lax.fori_loop(0, n_sub, body, 0, unroll=True)


# ---------------------------------------------------------------------------
# Tiling policy
# ---------------------------------------------------------------------------
def _pick_tile(Lp, B, C, in_bytes, out_bytes, budget=16 * 1024 * 1024):
    """Largest lane-tile (multiple of 128, <=2048) dividing padded L that fits
    a conservative double-buffered VMEM budget (v7x-safe); keeps >=2 L-tiles
    when B==1 so both v7x TensorCores get fed."""
    for t in (2048, 1024, 512, 256, 128):
        if Lp % t != 0:
            continue
        if 2 * C * t * (in_bytes + out_bytes) > budget:   # 2x buffers, in + out
            continue
        if B == 1 and Lp // t < 2 and t > 128:
            continue
        return t
    return 128


def _build_call(B, C, D, Lp, TL, SUB, out_dtype, eps):
    kern = functools.partial(_mamba_block_kernel, eps=eps, sub=SUB, n_sub=TL // SUB)
    return pl.pallas_call(
        kern,
        out_shape=jax.ShapeDtypeStruct((B, C, Lp), out_dtype),
        grid=(B, Lp // TL),
        in_specs=[
            pl.BlockSpec((pl.Squeezed(), C, TL), lambda b, l: (b, 0, l)),  # x
            pl.BlockSpec((C, 1), lambda b, l: (0, 0)),                     # ln gamma
            pl.BlockSpec((C, 1), lambda b, l: (0, 0)),                     # ln beta
            pl.BlockSpec((D, C), lambda b, l: (0, 0)),                     # w1' (bf16)
            pl.BlockSpec((D, 1), lambda b, l: (0, 0)),                     # b1'
            pl.BlockSpec((C, D), lambda b, l: (0, 0)),                     # w2 (bf16)
            pl.BlockSpec((C, 1), lambda b, l: (0, 0)),                     # b2
        ],
        out_specs=pl.BlockSpec((pl.Squeezed(), C, TL), lambda b, l: (b, 0, l)),
        compiler_params=pltpu.CompilerParams(
            dimension_semantics=("parallel", "parallel")),
    )


# ---------------------------------------------------------------------------
# Parameter prep (done ONCE, outside jit): fold LN#2 affine into Linear #1,
# pre-cast weights to bf16, reshape vectors for lane-broadcast in-kernel.
# ---------------------------------------------------------------------------
def prepare_mamba_block_params(params):
    C = params["gamma"].shape[0]
    D = params["w1"].shape[0]
    gamma = params["gamma"].astype(jnp.float32)
    beta = params["beta"].astype(jnp.float32)
    w1 = params["w1"].astype(jnp.float32)
    b1 = params["b1"].astype(jnp.float32)
    # The module reuses self.norm for both LayerNorms, so the second affine
    # (same gamma/beta) folds into Linear #1:  w1' = w1 * gamma,  b1' = w1@beta + b1.
    w1f = w1 * gamma[None, :]
    b1f = w1 @ beta + b1
    return {
        "gamma": gamma.reshape(C, 1),
        "beta": beta.reshape(C, 1),
        "w1": w1f.astype(jnp.bfloat16),
        "b1": b1f.reshape(D, 1),
        "w2": params["w2"].astype(jnp.bfloat16),
        "b2": params["b2"].astype(jnp.float32).reshape(C, 1),
    }


# ---------------------------------------------------------------------------
# Wrapper (whole forward under a single jax.jit)
# ---------------------------------------------------------------------------
def _forward(prep, x):
    B, C = x.shape[0], x.shape[1]
    L = 1
    for d in x.shape[2:]:
        L *= d
    D = prep["w1"].shape[0]

    # Pad L up to a multiple of 128 so every tile is lane-dense (no masked vst).
    Lp = -(-L // 128) * 128
    TL = _pick_tile(Lp, B, C, x.dtype.itemsize, x.dtype.itemsize)
    SUB = min(512, TL)

    x3 = x.reshape(B, C, L)                     # keep native dtype (no f32 upcast copy)
    if Lp != L:
        x3 = jnp.pad(x3, ((0, 0), (0, 0), (0, Lp - L)))

    out = _build_call(B, C, D, Lp, TL, SUB, x.dtype, 1e-5)(
        x3, prep["gamma"], prep["beta"], prep["w1"], prep["b1"],
        prep["w2"], prep["b2"])

    if Lp != L:
        out = out[:, :, :L]
    return out.reshape(x.shape)


mamba_block_apply = jax.jit(_forward)


# ---------------------------------------------------------------------------
# Pure-JAX reference (channels-last, mirrors the PyTorch forward; f32 weights)
# ---------------------------------------------------------------------------
def mamba_block_reference(params, x):
    B, C = x.shape[0], x.shape[1]
    L = 1
    for d in x.shape[2:]:
        L *= d
    xe = jnp.transpose(x.reshape(B, C, L), (0, 2, 1)).astype(jnp.float32)  # (B, L, C)

    def ln(t):
        mu = jnp.mean(t, axis=-1, keepdims=True)
        var = jnp.mean((t - mu) ** 2, axis=-1, keepdims=True)
        return (t - mu) / jnp.sqrt(var + 1e-5) * params["gamma"] + params["beta"]

    xn = ln(xe)
    xm = xn + xe                      # Mamba treated as identity (see TODO)
    xm = ln(xm)
    h = xm @ params["w1"].T + params["b1"]
    h = _gelu_tanh(h)
    y = h @ params["w2"].T + params["b2"]
    return jnp.transpose(y, (0, 2, 1)).reshape(x.shape).astype(x.dtype)


# ---------------------------------------------------------------------------
# Deterministic synthetic parameters
# ---------------------------------------------------------------------------
def make_mamba_block_params(key, input_dim, output_dim):
    k1, k2, k3, k4 = jax.random.split(key, 4)
    s = (2.0 / (input_dim + output_dim)) ** 0.5  # xavier-ish
    return {
        "gamma": 1.0 + 0.1 * jax.random.normal(k3, (input_dim,), jnp.float32),
        "beta": 0.05 * jax.random.normal(k4, (input_dim,), jnp.float32),
        "w1": s * jax.random.normal(k1, (output_dim, input_dim), jnp.float32),
        "b1": jnp.zeros((output_dim,), jnp.float32),
        "w2": s * jax.random.normal(k2, (input_dim, output_dim), jnp.float32),
        "b2": jnp.zeros((input_dim,), jnp.float32),
    }


# ---------------------------------------------------------------------------
if __name__ == "__main__":
    key = jax.random.PRNGKey(0)
    kx, kp = jax.random.split(key, 2)

    B, C, D, H, W = 2, 32, 64, 16, 16          # input_dim=32, output_dim=64
    x = jax.random.normal(kx, (B, C, H, W), jnp.float32)
    params = make_mamba_block_params(kp, C, D)
    prep = prepare_mamba_block_params(params)   # fold LN#2 affine, bf16-cast once

    out = mamba_block_apply(prep, x)
    out = jax.block_until_ready(out)

    assert out.shape == (B, C, H, W)
    ref = mamba_block_reference(params, x)
    assert bool(jnp.allclose(out, ref, atol=2e-2, rtol=5e-2)), \
        float(jnp.max(jnp.abs(out - ref)))

    print("KERNEL_OK")
</pallas_src>

<mosaic_0001>
module attributes {stable_mosaic.version = 11 : i64} {
  func.func @_mamba_block_kernel(%arg0: i32, %arg1: i32, %arg2: memref<1x32x256xf32, #tpu.memory_space<vmem>>, %arg3: memref<32x1xf32, #tpu.memory_space<vmem>>, %arg4: memref<32x1xf32, #tpu.memory_space<vmem>>, %arg5: memref<64x32xbf16, #tpu.memory_space<vmem>>, %arg6: memref<64x1xf32, #tpu.memory_space<vmem>>, %arg7: memref<32x64xbf16, #tpu.memory_space<vmem>>, %arg8: memref<32x1xf32, #tpu.memory_space<vmem>>, %arg9: memref<1x32x256xf32, #tpu.memory_space<vmem>>) attributes {dimension_semantics = [#tpu.dimension_semantics<parallel>, #tpu.dimension_semantics<parallel>], iteration_bounds = array<i64: 2, 1>, scalar_prefetch = 0 : i64, scratch_operands = 0 : i64, tpu.core_type = #tpu.core_type<tc>, window_params = [{transform_indices = @transform_0, window_bounds = array<i64: 1, 32, 256>}, {pipeline_mode = #tpu.pipeline_mode<synchronous>, transform_indices = @transform_1, window_bounds = array<i64: 32, 1>}, {pipeline_mode = #tpu.pipeline_mode<synchronous>, transform_indices = @transform_2, window_bounds = array<i64: 32, 1>}, {pipeline_mode = #tpu.pipeline_mode<synchronous>, transform_indices = @transform_3, window_bounds = array<i64: 64, 32>}, {pipeline_mode = #tpu.pipeline_mode<synchronous>, transform_indices = @transform_4, window_bounds = array<i64: 64, 1>}, {pipeline_mode = #tpu.pipeline_mode<synchronous>, transform_indices = @transform_5, window_bounds = array<i64: 32, 64>}, {pipeline_mode = #tpu.pipeline_mode<synchronous>, transform_indices = @transform_6, window_bounds = array<i64: 32, 1>}, {transform_indices = @transform_7, window_bounds = array<i64: 1, 32, 256>}]} {
    %c0 = arith.constant 0 : index
    %c0_0 = arith.constant 0 : index
    %0 = vector.load %arg3[%c0, %c0_0] : memref<32x1xf32, #tpu.memory_space<vmem>>, vector<32x1xf32>
    %c0_1 = arith.constant 0 : index
    %c0_2 = arith.constant 0 : index
    %1 = vector.load %arg4[%c0_1, %c0_2] : memref<32x1xf32, #tpu.memory_space<vmem>>, vector<32x1xf32>
    %c0_3 = arith.constant 0 : index
    %c0_4 = arith.constant 0 : index
    %2 = vector.load %arg5[%c0_3, %c0_4] : memref<64x32xbf16, #tpu.memory_space<vmem>>, vector<64x32xbf16>
    %c0_5 = arith.constant 0 : index
    %c0_6 = arith.constant 0 : index
    %3 = vector.load %arg6[%c0_5, %c0_6] : memref<64x1xf32, #tpu.memory_space<vmem>>, vector<64x1xf32>
    %c0_7 = arith.constant 0 : index
    %c0_8 = arith.constant 0 : index
    %4 = vector.load %arg7[%c0_7, %c0_8] : memref<32x64xbf16, #tpu.memory_space<vmem>>, vector<32x64xbf16>
    %c0_9 = arith.constant 0 : index
    %c0_10 = arith.constant 0 : index
    %5 = vector.load %arg8[%c0_9, %c0_10] : memref<32x1xf32, #tpu.memory_space<vmem>>, vector<32x1xf32>
    %c0_i32 = arith.constant 0 : i32
    %c256_i32 = arith.constant 256 : i32
    %6 = arith.muli %c0_i32, %c256_i32 : i32
    %7 = tpu.assume_multiple %6, 128 : i32
    %c0_11 = arith.constant 0 : index
    %c0_12 = arith.constant 0 : index
    %8 = arith.index_cast %7 : i32 to index
    %9 = vector.load %arg2[%c0_11, %c0_12, %8] : memref<1x32x256xf32, #tpu.memory_space<vmem>>, vector<1x32x256xf32>
    %10 = vector.shape_cast %9 : vector<1x32x256xf32> to vector<32x256xf32>
    %cst = arith.constant dense<0.000000e+00> : vector<256xf32>
    %11 = vector.multi_reduction <add>, %10, %cst [0] : vector<32x256xf32> to vector<256xf32>
    %12 = vector.shape_cast %11 : vector<256xf32> to vector<1x256xf32>
    %cst_13 = arith.constant 3.125000e-02 : f32
    %13 = vector.broadcast %cst_13 : f32 to vector<1x256xf32>
    %14 = arith.mulf %12, %13 : vector<1x256xf32>
    %15 = arith.mulf %10, %10 : vector<32x256xf32>
    %cst_14 = arith.constant dense<0.000000e+00> : vector<256xf32>
    %16 = vector.multi_reduction <add>, %15, %cst_14 [0] : vector<32x256xf32> to vector<256xf32>
    %17 = vector.shape_cast %16 : vector<256xf32> to vector<1x256xf32>
    %cst_15 = arith.constant 3.125000e-02 : f32
    %18 = vector.broadcast %cst_15 : f32 to vector<1x256xf32>
    %19 = arith.mulf %17, %18 : vector<1x256xf32>
    %20 = arith.mulf %14, %14 : vector<1x256xf32>
    %21 = arith.subf %19, %20 : vector<1x256xf32>
    %22 = vector.broadcast %14 : vector<1x256xf32> to vector<32x256xf32>
    %23 = arith.subf %10, %22 : vector<32x256xf32>
    %cst_16 = arith.constant 9.99999974E-6 : f32
    %24 = vector.broadcast %cst_16 : f32 to vector<1x256xf32>
    %25 = arith.addf %21, %24 : vector<1x256xf32>
    %26 = math.rsqrt %25 : vector<1x256xf32>
    %27 = vector.broadcast %26 : vector<1x256xf32> to vector<32x256xf32>
    %28 = arith.mulf %23, %27 : vector<32x256xf32>
    %29 = vector.broadcast %0 : vector<32x1xf32> to vector<32x256xf32>
    %30 = arith.mulf %28, %29 : vector<32x256xf32>
    %31 = vector.broadcast %1 : vector<32x1xf32> to vector<32x256xf32>
    %32 = arith.addf %30, %31 : vector<32x256xf32>
    %33 = arith.addf %32, %10 : vector<32x256xf32>
    %cst_17 = arith.constant dense<0.000000e+00> : vector<256xf32>
    %34 = vector.multi_reduction <add>, %33, %cst_17 [0] : vector<32x256xf32> to vector<256xf32>
    %35 = vector.shape_cast %34 : vector<256xf32> to vector<1x256xf32>
    %cst_18 = arith.constant 3.125000e-02 : f32
    %36 = vector.broadcast %cst_18 : f32 to vector<1x256xf32>
    %37 = arith.mulf %35, %36 : vector<1x256xf32>
    %38 = arith.mulf %33, %33 : vector<32x256xf32>
    %cst_19 = arith.constant dense<0.000000e+00> : vector<256xf32>
    %39 = vector.multi_reduction <add>, %38, %cst_19 [0] : vector<32x256xf32> to vector<256xf32>
    %40 = vector.shape_cast %39 : vector<256xf32> to vector<1x256xf32>
    %cst_20 = arith.constant 3.125000e-02 : f32
    %41 = vector.broadcast %cst_20 : f32 to vector<1x256xf32>
    %42 = arith.mulf %40, %41 : vector<1x256xf32>
    %43 = arith.mulf %37, %37 : vector<1x256xf32>
    %44 = arith.subf %42, %43 : vector<1x256xf32>
    %45 = vector.broadcast %37 : vector<1x256xf32> to vector<32x256xf32>
    %46 = arith.subf %33, %45 : vector<32x256xf32>
    %cst_21 = arith.constant 9.99999974E-6 : f32
    %47 = vector.broadcast %cst_21 : f32 to vector<1x256xf32>
    %48 = arith.addf %44, %47 : vector<1x256xf32>
    %49 = math.rsqrt %48 : vector<1x256xf32>
    %50 = vector.broadcast %49 : vector<1x256xf32> to vector<32x256xf32>
    %51 = arith.mulf %46, %50 : vector<32x256xf32>
    %52 = arith.truncf %51 : vector<32x256xf32> to vector<32x256xbf16>
    %cst_22 = arith.constant dense<0.000000e+00> : vector<64x256xf32>
    %53 = tpu.matmul %2, %52, %cst_22 {dimension_numbers = #tpu.dot_dimension_numbers<[1], [0], [0], [1], [0, 0, 1, 1], [], []>} : vector<64x32xbf16>, vector<32x256xbf16>, vector<64x256xf32> -> vector<64x256xf32>
    %54 = vector.broadcast %3 : vector<64x1xf32> to vector<64x256xf32>
    %55 = arith.addf %53, %54 : vector<64x256xf32>
    %cst_23 = arith.constant 5.000000e-01 : f32
    %56 = vector.broadcast %cst_23 : f32 to vector<64x256xf32>
    %57 = arith.mulf %56, %55 : vector<64x256xf32>
    %cst_24 = arith.constant 4.471500e-02 : f32
    %58 = vector.broadcast %cst_24 : f32 to vector<64x256xf32>
    %59 = arith.mulf %58, %55 : vector<64x256xf32>
    %60 = arith.mulf %59, %55 : vector<64x256xf32>
    %61 = arith.mulf %60, %55 : vector<64x256xf32>
    %62 = arith.addf %55, %61 : vector<64x256xf32>
    %cst_25 = arith.constant 0.797884583 : f32
    %63 = vector.broadcast %cst_25 : f32 to vector<64x256xf32>
    %64 = arith.mulf %63, %62 : vector<64x256xf32>
    %65 = math.tanh %64 : vector<64x256xf32>
    %cst_26 = arith.constant 1.000000e+00 : f32
    %66 = vector.broadcast %cst_26 : f32 to vector<64x256xf32>
    %67 = arith.addf %66, %65 : vector<64x256xf32>
    %68 = arith.mulf %57, %67 : vector<64x256xf32>
    %69 = arith.truncf %68 : vector<64x256xf32> to vector<64x256xbf16>
    %cst_27 = arith.constant dense<0.000000e+00> : vector<32x256xf32>
    %70 = tpu.matmul %4, %69, %cst_27 {dimension_numbers = #tpu.dot_dimension_numbers<[1], [0], [0], [1], [0, 0, 1, 1], [], []>} : vector<32x64xbf16>, vector<64x256xbf16>, vector<32x256xf32> -> vector<32x256xf32>
    %71 = vector.broadcast %5 : vector<32x1xf32> to vector<32x256xf32>
    %72 = arith.addf %70, %71 : vector<32x256xf32>
    %c0_28 = arith.constant 0 : index
    %c0_29 = arith.constant 0 : index
    %73 = arith.index_cast %7 : i32 to index
    %74 = vector.load %arg9[%c0_28, %c0_29, %73] : memref<1x32x256xf32, #tpu.memory_space<vmem>>, vector<1x32x256xf32>
    %75 = vector.shape_cast %74 : vector<1x32x256xf32> to vector<32x256xf32>
    %76 = vector.shape_cast %72 : vector<32x256xf32> to vector<1x32x256xf32>
    tpu.vector_store %arg9[%c0_28, %c0_29, %73], %76 {strides = array<i32>} : memref<1x32x256xf32, #tpu.memory_space<vmem>>, vector<1x32x256xf32>,
    %c1_i32 = arith.constant 1 : i32
    return
  }
  func.func @transform_0(%arg0: i32, %arg1: i32) -> (i32, i32, i32) {
    %c0_i32 = arith.constant 0 : i32
    %c0_i32_0 = arith.constant 0 : i32
    return %arg0, %c0_i32, %arg1 : i32, i32, i32
  }
  func.func @transform_1(%arg0: i32, %arg1: i32) -> (i32, i32) {
    %c0_i32 = arith.constant 0 : i32
    %c0_i32_0 = arith.constant 0 : i32
    %c0_i32_1 = arith.constant 0 : i32
    return %c0_i32, %c0_i32_0 : i32, i32
  }
  func.func @transform_2(%arg0: i32, %arg1: i32) -> (i32, i32) {
    %c0_i32 = arith.constant 0 : i32
    %c0_i32_0 = arith.constant 0 : i32
    %c0_i32_1 = arith.constant 0 : i32
    return %c0_i32, %c0_i32_0 : i32, i32
  }
  func.func @transform_3(%arg0: i32, %arg1: i32) -> (i32, i32) {
    %c0_i32 = arith.constant 0 : i32
    %c0_i32_0 = arith.constant 0 : i32
    %c0_i32_1 = arith.constant 0 : i32
    return %c0_i32, %c0_i32_0 : i32, i32
  }
  func.func @transform_4(%arg0: i32, %arg1: i32) -> (i32, i32) {
    %c0_i32 = arith.constant 0 : i32
    %c0_i32_0 = arith.constant 0 : i32
    %c0_i32_1 = arith.constant 0 : i32
    return %c0_i32, %c0_i32_0 : i32, i32
  }
  func.func @transform_5(%arg0: i32, %arg1: i32) -> (i32, i32) {
    %c0_i32 = arith.constant 0 : i32
    %c0_i32_0 = arith.constant 0 : i32
    %c0_i32_1 = arith.constant 0 : i32
    return %c0_i32, %c0_i32_0 : i32, i32
  }
  func.func @transform_6(%arg0: i32, %arg1: i32) -> (i32, i32) {
    %c0_i32 = arith.constant 0 : i32
    %c0_i32_0 = arith.constant 0 : i32
    %c0_i32_1 = arith.constant 0 : i32
    return %c0_i32, %c0_i32_0 : i32, i32
  }
  func.func @transform_7(%arg0: i32, %arg1: i32) -> (i32, i32, i32) {
    %c0_i32 = arith.constant 0 : i32
    %c0_i32_0 = arith.constant 0 : i32
    return %arg0, %c0_i32, %arg1 : i32, i32, i32
  }
}

</mosaic_0001>

<llo_original>
// kernel: _forward.1
$region0: #{_forward.1}
  #allocation0 [shape = 'u32[]', space=smem, size = 0x4, offset = 0x4, fixed_abs, tag = 'smem constant byte address 0x4 - core index']
  #allocation1 [shape = 'u32[144,128]{1,0:T(1,128)}', space=vmem, size = 0x12000, scoped, tag = 'internal scratch']
  %s0 = inlined_call_operand.vmem [shape: f32[2,32,256], index: 0, kind: input, shape index: {}]
  %s1 = inlined_call_operand.vmem [shape: f32[32,1], index: 1, kind: input, shape index: {}]
  %s2 = inlined_call_operand.vmem [shape: f32[32,1], index: 2, kind: input, shape index: {}]
  %s3 = inlined_call_operand.vmem [shape: bf16[64,32], index: 3, kind: input, shape index: {}]
  %s4 = inlined_call_operand.vmem [shape: f32[64,1], index: 4, kind: input, shape index: {}]
  %s5 = inlined_call_operand.vmem [shape: bf16[32,64], index: 5, kind: input, shape index: {}]
  %s6 = inlined_call_operand.vmem [shape: f32[32,1], index: 6, kind: input, shape index: {}]
  %s7 = inlined_call_operand.vmem [shape: f32[2,32,256], index: 7, kind: output, shape index: {}]
  %s8 = sld [smem:[#allocation0]]
  $region61: #{_forward.1} parent=0
    _
  %s10 = ssub.s32 1, %s8
  %s11 = scalar_select 0, %s10, %s8
  loop: start=0, step=1, limit=4
  $region2: #{_forward.1} parent=0 // loop_pre_header
    _
  $region3: #{_forward.1} parent=0 // loop_header
    %s13 = sphi 0, %s17
    %p14 = scmp.ge.s32.totalorder %s13, 4
    %s20 = sphi 0, %s32
    %s21 = sphi 0, %s28
    %s22 = sphi 0, %s20
    %s23 = sphi 0, %s21
    %s24 = sphi 0, %s22
    %s25 = sphi 0, %s23
    %s37 = sphi 0, %s39
    %s40 = sphi 0, %s37
    %s41 = sphi 0, %s40
    %s57 = sphi 0, %s41
    %s61 = sphi 0, %s61
    %s63 = sphi 0, %s61
    %s64 = sphi 0, %s63
    %s78 = sphi 0, %s64
    %s82 = sphi 0, %s82
    %s84 = sphi 0, %s82
    %s85 = sphi 0, %s84
    %s99 = sphi 0, %s85
    %s103 = sphi 0, %s103
    %s105 = sphi 0, %s103
    %s106 = sphi 0, %s105
    %s120 = sphi 0, %s106
    %s124 = sphi 0, %s124
    %s126 = sphi 0, %s124
    %s127 = sphi 0, %s126
    %s141 = sphi 0, %s127
    %s145 = sphi 0, %s145
    %s147 = sphi 0, %s145
    %s148 = sphi 0, %s147
    %s162 = sphi 0, %s148
    %s166 = sphi 0, %s166
    %s168 = sphi 0, %s166
    %s169 = sphi 0, %s168
    %s183 = sphi 0, %s169
    %s191 = sphi 0, %s193
    %s194 = sphi 0, %s191
    %s195 = sphi 0, %s194
    %s211 = sphi 0, %s195
  $region4: #{_forward.1} parent=0 // loop_header_branch
    %16 = sbr.rel (%p14) target = $region8
  $region5: #{_forward.1} parent=0 // loop_body
    %s18 = ssub.s32 %s13, 1
    %s19 = ssub.s32 %s13, 2
    %s26 = sadd.s32 1, %s21
    %p27 = scmp.ge.s32.totalorder %s26, 1
    %s28 = scalar_select %p27, 0, %s26
    %s29 = sadd.s32 1, %s20
    %s30 = scalar_select %p27, %s29, %s20
    %p31 = scmp.ge.s32.totalorder %s30, 2
    %s32 = scalar_select %p31, 0, %s30
    %s33 = ssub.s32 %s20, %s32
    %s34 = ssub.s32 %s21, %s28
    %s35 = sor.u32 %s33, %s34
    %p36 = scmp.eq.s32.totalorder %s35, 0
    %s38 = sadd.s32 %s37, 1
    %s39 = scalar_select %p36, %s37, %s38
    %p42 = pneg %p36
    %p43 = scmp.eq.s32.totalorder %s13, 1
    %p44 = por %p42, %p43
    %p45 = scmp.ne.s32.totalorder %s37, %s40
    %p46 = scmp.eq.s32.totalorder %s13, 0
    %p47 = por %p45, %p46
    %p48 = scmp.ne.s32.totalorder %s37, %s40
    %p49 = scmp.eq.s32.totalorder %s18, 1
    %p50 = por %p48, %p49
    %p51 = scmp.ne.s32.totalorder %s40, %s41
    %p52 = scmp.eq.s32.totalorder %s18, 0
    %p53 = por %p51, %p52
    %p54 = scmp.ne.s32.totalorder %s40, %s41
    %p55 = scmp.eq.s32.totalorder %s19, 1
    %p56 = por %p54, %p55
    %p58 = scmp.ne.s32.totalorder %s41, %s57
    %p59 = scmp.eq.s32.totalorder %s19, 0
    %p60 = por %p58, %p59
    %s62 = sadd.s32 %s61, 1
    %p65 = scmp.eq.s32.totalorder %s13, 1
    %p66 = scmp.ne.s32.totalorder %s61, %s63
    %p67 = scmp.eq.s32.totalorder %s13, 0
    %p68 = por %p66, %p67
    %p69 = scmp.ne.s32.totalorder %s61, %s63
    %p70 = scmp.eq.s32.totalorder %s18, 1
    %p71 = por %p69, %p70
    %p72 = scmp.ne.s32.totalorder %s63, %s64
    %p73 = scmp.eq.s32.totalorder %s18, 0
    %p74 = por %p72, %p73
    %p75 = scmp.ne.s32.totalorder %s63, %s64
    %p76 = scmp.eq.s32.totalorder %s19, 1
    %p77 = por %p75, %p76
    %p79 = scmp.ne.s32.totalorder %s64, %s78
    %p80 = scmp.eq.s32.totalorder %s19, 0
    %p81 = por %p79, %p80
    %s83 = sadd.s32 %s82, 1
    %p86 = scmp.eq.s32.totalorder %s13, 1
    %p87 = scmp.ne.s32.totalorder %s82, %s84
    %p88 = scmp.eq.s32.totalorder %s13, 0
    %p89 = por %p87, %p88
    %p90 = scmp.ne.s32.totalorder %s82, %s84
    %p91 = scmp.eq.s32.totalorder %s18, 1
    %p92 = por %p90, %p91
    %p93 = scmp.ne.s32.totalorder %s84, %s85
    %p94 = scmp.eq.s32.totalorder %s18, 0
    %p95 = por %p93, %p94
    %p96 = scmp.ne.s32.totalorder %s84, %s85
    %p97 = scmp.eq.s32.totalorder %s19, 1
    %p98 = por %p96, %p97
    %p100 = scmp.ne.s32.totalorder %s85, %s99
    %p101 = scmp.eq.s32.totalorder %s19, 0
    %p102 = por %p100, %p101
    %s104 = sadd.s32 %s103, 1
    %p107 = scmp.eq.s32.totalorder %s13, 1
    %p108 = scmp.ne.s32.totalorder %s103, %s105
    %p109 = scmp.eq.s32.totalorder %s13, 0
    %p110 = por %p108, %p109
    %p111 = scmp.ne.s32.totalorder %s103, %s105
    %p112 = scmp.eq.s32.totalorder %s18, 1
    %p113 = por %p111, %p112
    %p114 = scmp.ne.s32.totalorder %s105, %s106
    %p115 = scmp.eq.s32.totalorder %s18, 0
    %p116 = por %p114, %p115
    %p117 = scmp.ne.s32.totalorder %s105, %s106
    %p118 = scmp.eq.s32.totalorder %s19, 1
    %p119 = por %p117, %p118
    %p121 = scmp.ne.s32.totalorder %s106, %s120
    %p122 = scmp.eq.s32.totalorder %s19, 0
    %p123 = por %p121, %p122
    %s125 = sadd.s32 %s124, 1
    %p128 = scmp.eq.s32.totalorder %s13, 1
    %p129 = scmp.ne.s32.totalorder %s124, %s126
    %p130 = scmp.eq.s32.totalorder %s13, 0
    %p131 = por %p129, %p130
    %p132 = scmp.ne.s32.totalorder %s124, %s126
    %p133 = scmp.eq.s32.totalorder %s18, 1
    %p134 = por %p132, %p133
    %p135 = scmp.ne.s32.totalorder %s126, %s127
    %p136 = scmp.eq.s32.totalorder %s18, 0
    %p137 = por %p135, %p136
    %p138 = scmp.ne.s32.totalorder %s126, %s127
    %p139 = scmp.eq.s32.totalorder %s19, 1
    %p140 = por %p138, %p139
    %p142 = scmp.ne.s32.totalorder %s127, %s141
    %p143 = scmp.eq.s32.totalorder %s19, 0
    %p144 = por %p142, %p143
    %s146 = sadd.s32 %s145, 1
    %p149 = scmp.eq.s32.totalorder %s13, 1
    %p150 = scmp.ne.s32.totalorder %s145, %s147
    %p151 = scmp.eq.s32.totalorder %s13, 0
    %p152 = por %p150, %p151
    %p153 = scmp.ne.s32.totalorder %s145, %s147
    %p154 = scmp.eq.s32.totalorder %s18, 1
    %p155 = por %p153, %p154
    %p156 = scmp.ne.s32.totalorder %s147, %s148
    %p157 = scmp.eq.s32.totalorder %s18, 0
    %p158 = por %p156, %p157
    %p159 = scmp.ne.s32.totalorder %s147, %s148
    %p160 = scmp.eq.s32.totalorder %s19, 1
    %p161 = por %p159, %p160
    %p163 = scmp.ne.s32.totalorder %s148, %s162
    %p164 = scmp.eq.s32.totalorder %s19, 0
    %p165 = por %p163, %p164
    %s167 = sadd.s32 %s166, 1
    %p170 = scmp.eq.s32.totalorder %s13, 1
    %p171 = scmp.ne.s32.totalorder %s166, %s168
    %p172 = scmp.eq.s32.totalorder %s13, 0
    %p173 = por %p171, %p172
    %p174 = scmp.ne.s32.totalorder %s166, %s168
    %p175 = scmp.eq.s32.totalorder %s18, 1
    %p176 = por %p174, %p175
    %p177 = scmp.ne.s32.totalorder %s168, %s169
    %p178 = scmp.eq.s32.totalorder %s18, 0
    %p179 = por %p177, %p178
    %p180 = scmp.ne.s32.totalorder %s168, %s169
    %p181 = scmp.eq.s32.totalorder %s19, 1
    %p182 = por %p180, %p181
    %p184 = scmp.ne.s32.totalorder %s169, %s183
    %p185 = scmp.eq.s32.totalorder %s19, 0
    %p186 = por %p184, %p185
    %s187 = ssub.s32 %s20, %s32
    %s188 = ssub.s32 %s21, %s28
    %s189 = sor.u32 %s187, %s188
    %p190 = scmp.eq.s32.totalorder %s189, 0
    %s192 = sadd.s32 %s191, 1
    %s193 = scalar_select %p190, %s191, %s192
    %p196 = pneg %p190
    %p197 = scmp.eq.s32.totalorder %s13, 1
    %p198 = por %p196, %p197
    %p199 = scmp.ne.s32.totalorder %s191, %s194
    %p200 = scmp.eq.s32.totalorder %s13, 0
    %p201 = por %p199, %p200
    %p202 = scmp.ne.s32.totalorder %s191, %s194
    %p203 = scmp.eq.s32.totalorder %s18, 1
    %p204 = por %p202, %p203
    %p205 = scmp.ne.s32.totalorder %s194, %s195
    %p206 = scmp.eq.s32.totalorder %s18, 0
    %p207 = por %p205, %p206
    %p208 = scmp.ne.s32.totalorder %s194, %s195
    %p209 = scmp.eq.s32.totalorder %s19, 1
    %p210 = por %p208, %p209
    %p212 = scmp.ne.s32.totalorder %s195, %s211
    %p213 = scmp.eq.s32.totalorder %s19, 0
    %p214 = por %p212, %p213
    %p215 = scmp.le.s32.totalorder 1, %s13
    %p216 = scmp.lt.s32.totalorder %s13, 3
    %p217 = pnand %p215, %p216
    %p218 = pneg %p217
    // Predicated region
    $region9: #{_forward.1} parent=5 // pred_check
      _
    $region10: #{_forward.1} parent=5 // pred_check_branch
      %220 = sbr.rel (%p217) target = $region12
    $region11: #{_forward.1} parent=5 // pred_region
      %s221 = ssub.s32 %s13, 1
      // Predicated region
      $region13: #{_forward.1} parent=11 // pred_check
        %p222 = pneg %p74
      $region14: #{_forward.1} parent=11 // pred_check_branch
        %224 = sbr.rel (%p222) target = $region16
      $region15: #{_forward.1} parent=11 // pred_region
        _
      $region16: #{_forward.1} parent=11 // pred_fallthru
        _
      // Predicated region
      $region17: #{_forward.1} parent=11 // pred_check
        %p225 = pneg %p95
      $region18: #{_forward.1} parent=11 // pred_check_branch
        %227 = sbr.rel (%p225) target = $region20
      $region19: #{_forward.1} parent=11 // pred_region
        _
      $region20: #{_forward.1} parent=11 // pred_fallthru
        _
      // Predicated region
      $region21: #{_forward.1} parent=11 // pred_check
        %p228 = pneg %p116
      $region22: #{_forward.1} parent=11 // pred_check_branch
        %230 = sbr.rel (%p228) target = $region24
      $region23: #{_forward.1} parent=11 // pred_region
        _
      $region24: #{_forward.1} parent=11 // pred_fallthru
        _
      // Predicated region
      $region25: #{_forward.1} parent=11 // pred_check
        %p231 = pneg %p137
      $region26: #{_forward.1} parent=11 // pred_check_branch
        %233 = sbr.rel (%p231) target = $region28
      $region27: #{_forward.1} parent=11 // pred_region
        _
      $region28: #{_forward.1} parent=11 // pred_fallthru
        _
      // Predicated region
      $region29: #{_forward.1} parent=11 // pred_check
        %p234 = pneg %p158
      $region30: #{_forward.1} parent=11 // pred_check_branch
        %236 = sbr.rel (%p234) target = $region32
      $region31: #{_forward.1} parent=11 // pred_region
        _
      $region32: #{_forward.1} parent=11 // pred_fallthru
        _
      // Predicated region
      $region33: #{_forward.1} parent=11 // pred_check
        %p237 = pneg %p179
      $region34: #{_forward.1} parent=11 // pred_check_branch
        %239 = sbr.rel (%p237) target = $region36
      $region35: #{_forward.1} parent=11 // pred_region
        _
      $region36: #{_forward.1} parent=11 // pred_fallthru
        _
    $region12: #{_forward.1} parent=5 // pred_fallthru
      _
    %p240 = scmp.lt.s32.totalorder %s13, 2
    // Predicated region
    $region37: #{_forward.1} parent=5 // pred_check
      %p241 = pneg %p240
    $region38: #{_forward.1} parent=5 // pred_check_branch
      %243 = sbr.rel (%p241) target = $region40
    $region39: #{_forward.1} parent=5 // pred_region
      // Predicated region
      $region41: #{_forward.1} parent=39 // pred_check
        %p244 = pneg %p47
      $region42: #{_forward.1} parent=39 // pred_check_branch
        %246 = sbr.rel (%p244) target = $region44
      $region43: #{_forward.1} parent=39 // pred_region
        %s247 = smul.u32 2, %s21
        %p248 = scmp.lt.s32.totalorder %s20, 1
        %s249 = scalar_select %p248, %s20, 1
        %p250 = scmp.lt.s32.totalorder %s247, 1
        %s251 = scalar_select %p250, %s247, 1
        %s252 = smul.addr %s249, 8
        %s253 = sadd.s32 %s251, %s252
        %s254 = smul.addr %s253, 8
        %s255 = scalar_lea.vmem %s0, %s254
        %s256 = smul.u32 2, %s21
      $region44: #{_forward.1} parent=39 // pred_fallthru
        _
    $region40: #{_forward.1} parent=5 // pred_fallthru
      _
    %p257 = scmp.le.s32.totalorder 1, %s13
    %p258 = scmp.lt.s32.totalorder %s13, 3
    %p259 = pnand %p257, %p258
    %p260 = pneg %p259
    // Predicated region
    $region45: #{_forward.1} parent=5 // pred_check
      _
    $region46: #{_forward.1} parent=5 // pred_check_branch
      %262 = sbr.rel (%p259) target = $region48
    $region47: #{_forward.1} parent=5 // pred_region
      %s263 = ssub.s32 %s13, 1
      %s264 = smul.u32 2, %s23
      %p265 = scmp.lt.s32.totalorder %s22, 1
      %s266 = scalar_select %p265, %s22, 1
      %p267 = scmp.lt.s32.totalorder %s264, 1
      %s268 = scalar_select %p267, %s264, 1
      %s269 = smul.addr %s266, 8
      %s270 = sadd.s32 %s268, %s269
      %s271 = smul.addr %s270, 8
      %s272 = scalar_lea.vmem %s0, %s271
      %p273 = pneg %p53
      %p274 = pneg %p50
      %p275 = pneg %p74
      %p276 = pneg %p71
      %p277 = pneg %p95
      %p278 = pneg %p92
      %p279 = pneg %p116
      %p280 = pneg %p113
      %p281 = pneg %p137
      %p282 = pneg %p134
      %p283 = pneg %p158
      %p284 = pneg %p155
      %p285 = pneg %p179
      %p286 = pneg %p176
      %p287 = pneg %p207
      %p288 = pneg %p204
      %s289 = smul.u32 2, %s23
      %p290 = scmp.lt.s32.totalorder %s22, 1
      %s291 = scalar_select %p290, %s22, 1
      %p292 = scmp.lt.s32.totalorder %s289, 1
      %s293 = scalar_select %p292, %s289, 1
      %s294 = smul.addr %s291, 8
      %s295 = sadd.s32 %s293, %s294
      %s296 = smul.addr %s295, 8
      %s297 = scalar_lea.vmem %s7, %s296
      %s298 = smul.u32 2, %s23
      %p299 = scmp.lt.s32.totalorder %s22, 1
      %s300 = scalar_select %p299, %s22, 1
      %p301 = scmp.lt.s32.totalorder %s298, 1
      %s302 = scalar_select %p301, %s298, 1
      %s303 = smul.addr %s300, 8
      %s304 = sadd.s32 %s302, %s303
      %s305 = smul.addr %s304, 8
      %s306 = scalar_lea.vmem %s0, %s305
      %s307 = smul.u32 2, %s23
      %s308 = smul.u32 2, %s23
      %p309 = scmp.lt.s32.totalorder %s22, 1
      %s310 = scalar_select %p309, %s22, 1
      %p311 = scmp.lt.s32.totalorder %s308, 1
      %s312 = scalar_select %p311, %s308, 1
      %s313 = smul.addr %s310, 8
      %s314 = sadd.s32 %s312, %s313
      %s315 = smul.addr %s314, 8
      %s316 = scalar_lea.vmem %s7, %s315
      %s317 = smul.u32 2, %s23
      %v319 = vld [vmem:[%s1] sm:$0xff]
      %v320 = vld [vmem:[%s1 + $0x8] sm:$0xff]
      %v321 = vld [vmem:[%s1 + $0x10] sm:$0xff]
      %v322 = vld [vmem:[%s1 + $0x18] sm:$0xff]
      %v323 = vld [vmem:[%s2] sm:$0xff]
      %v324 = vld [vmem:[%s2 + $0x8] sm:$0xff]
      %v325 = vld [vmem:[%s2 + $0x10] sm:$0xff]
      %v326 = vld [vmem:[%s2 + $0x18] sm:$0xff]
      %v327 = vld [vmem:[%s3] sm:$0xf]
      %v328 = vld [vmem:[%s3 + $0x4] sm:$0xf]
      %v329 = vld [vmem:[%s3 + $0x8] sm:$0xf]
      %v330 = vld [vmem:[%s3 + $0xc] sm:$0xf]
      %v331 = vld [vmem:[%s3 + $0x10] sm:$0xf]
      %v332 = vld [vmem:[%s3 + $0x14] sm:$0xf]
      %v333 = vld [vmem:[%s3 + $0x18] sm:$0xf]
      %v334 = vld [vmem:[%s3 + $0x1c] sm:$0xf]
      %v335 = vld [vmem:[%s4] sm:$0xff]
      %v336 = vld [vmem:[%s4 + $0x8] sm:$0xff]
      %v337 = vld [vmem:[%s4 + $0x10] sm:$0xff]
      %v338 = vld [vmem:[%s4 + $0x18] sm:$0xff]
      %v339 = vld [vmem:[%s4 + $0x20] sm:$0xff]
      %v340 = vld [vmem:[%s4 + $0x28] sm:$0xff]
      %v341 = vld [vmem:[%s4 + $0x30] sm:$0xff]
      %v342 = vld [vmem:[%s4 + $0x38] sm:$0xff]
      %v343 = vld [vmem:[%s5] sm:$0xf]
      %v344 = vld [vmem:[%s5 + $0x4] sm:$0xf]
      %v345 = vld [vmem:[%s5 + $0x8] sm:$0xf]
      %v346 = vld [vmem:[%s5 + $0xc] sm:$0xf]
      %v347 = vld [vmem:[%s6] sm:$0xff]
      %v348 = vld [vmem:[%s6 + $0x8] sm:$0xff]
      %v349 = vld [vmem:[%s6 + $0x10] sm:$0xff]
      %v350 = vld [vmem:[%s6 + $0x18] sm:$0xff]
      %v351 = vld [vmem:[%s306] sm:$0xff]
      %v352 = vld [vmem:[%s306 + $0x8] sm:$0xff]
      %v353 = vld [vmem:[%s306 + $0x10] sm:$0xff]
      %v354 = vld [vmem:[%s306 + $0x18] sm:$0xff]
      %v355 = vld [vmem:[%s306 + $0x20] sm:$0xff]
      %v356 = vld [vmem:[%s306 + $0x28] sm:$0xff]
      %v357 = vld [vmem:[%s306 + $0x30] sm:$0xff]
      %v358 = vld [vmem:[%s306 + $0x38] sm:$0xff]
      %v359 = vadd.f32 %v351, %v353
      %v360 = vadd.f32 %v359, %v355
      %v361 = vadd.f32 %v360, %v357
      %v362 = vrot.slane %v361, 4
      %v363 = vadd.f32 %v361, %v362
      %v364 = vrot.slane %v363, 2
      %v365 = vadd.f32 %v363, %v364
      %v366 = vrot.slane %v365, 1
      %v367 = vadd.f32 %v365, %v366
      %v368 = vadd.f32 %v352, %v354
      %v369 = vadd.f32 %v368, %v356
      %v370 = vadd.f32 %v369, %v358
      %v371 = vrot.slane %v370, 4
      %v372 = vadd.f32 %v370, %v371
      %v373 = vrot.slane %v372, 2
      %v374 = vadd.f32 %v372, %v373
      %v375 = vrot.slane %v374, 1
      %v376 = vadd.f32 %v374, %v375
      %v377 = vmul.f32 %v367, 0.03125
      %v378 = vmul.f32 %v376, 0.03125
      %v379 = vmul.f32 %v351, %v351
      %v380 = vmul.f32 %v352, %v352
      %v381 = vmul.f32 %v353, %v353
      %v382 = vmul.f32 %v354, %v354
      %v383 = vmul.f32 %v355, %v355
      %v384 = vmul.f32 %v356, %v356
      %v385 = vmul.f32 %v357, %v357
      %v386 = vmul.f32 %v358, %v358
      %v387 = vadd.f32 %v379, %v381
      %v388 = vadd.f32 %v387, %v383
      %v389 = vadd.f32 %v388, %v385
      %v390 = vrot.slane %v389, 4
      %v391 = vadd.f32 %v389, %v390
      %v392 = vrot.slane %v391, 2
      %v393 = vadd.f32 %v391, %v392
      %v394 = vrot.slane %v393, 1
      %v395 = vadd.f32 %v393, %v394
      %v396 = vadd.f32 %v380, %v382
      %v397 = vadd.f32 %v396, %v384
      %v398 = vadd.f32 %v397, %v386
      %v399 = vrot.slane %v398, 4
      %v400 = vadd.f32 %v398, %v399
      %v401 = vrot.slane %v400, 2
      %v402 = vadd.f32 %v400, %v401
      %v403 = vrot.slane %v402, 1
      %v404 = vadd.f32 %v402, %v403
      %v405 = vmul.f32 %v395, 0.03125
      %v406 = vmul.f32 %v404, 0.03125
      %v407 = vmul.f32 %v377, %v377
      %v408 = vmul.f32 %v378, %v378
      %v409 = vsub.f32 %v405, %v407
      %v410 = vsub.f32 %v406, %v408
      %v411 = vsub.f32 %v351, %v377
      %v412 = vsub.f32 %v352, %v378
      %v413 = vsub.f32 %v353, %v377
      %v414 = vsub.f32 %v354, %v378
      %v415 = vsub.f32 %v355, %v377
      %v416 = vsub.f32 %v356, %v378
      %v417 = vsub.f32 %v357, %v377
      %v418 = vsub.f32 %v358, %v378
      %v419 = vadd.f32 %v409, 1e-05
      %v420 = vadd.f32 %v410, 1e-05
      %v421 = vrsqrt.pop %v419
      %v422 = vrsqrt.pop %v420
      %v423 = vmul.f32 %v411, %v421
      %v424 = vmul.f32 %v412, %v422
      %v425 = vmul.f32 %v413, %v421
      %v426 = vmul.f32 %v414, %v422
      %v427 = vmul.f32 %v415, %v421
      %v428 = vmul.f32 %v416, %v422
      %v429 = vmul.f32 %v417, %v421
      %v430 = vmul.f32 %v418, %v422
      %432 = vset.pattern.permute.xlu0 0
      %433 = vperm.xlu0 %432, %v319
      %v434 = vpop.permute.xlu0 %433
      %437 = vset.pattern.permute.xlu0 0
      %438 = vperm.xlu0 %437, %v320
      %v439 = vpop.permute.xlu0 %438
      %442 = vset.pattern.permute.xlu0 0
      %443 = vperm.xlu0 %442, %v321
      %v444 = vpop.permute.xlu0 %443
      %447 = vset.pattern.permute.xlu0 0
      %448 = vperm.xlu0 %447, %v322
      %v449 = vpop.permute.xlu0 %448
      %v451 = vmul.f32 %v423, %v434
      %v452 = vmul.f32 %v424, %v434
      %v453 = vmul.f32 %v425, %v439
      %v454 = vmul.f32 %v426, %v439
      %v455 = vmul.f32 %v427, %v444
      %v456 = vmul.f32 %v428, %v444
      %v457 = vmul.f32 %v429, %v449
      %v458 = vmul.f32 %v430, %v449
      %460 = vset.pattern.permute.xlu0 0
      %461 = vperm.xlu0 %460, %v323
      %v462 = vpop.permute.xlu0 %461
      %465 = vset.pattern.permute.xlu0 0
      %466 = vperm.xlu0 %465, %v324
      %v467 = vpop.permute.xlu0 %466
      %470 = vset.pattern.permute.xlu0 0
      %471 = vperm.xlu0 %470, %v325
      %v472 = vpop.permute.xlu0 %471
      %475 = vset.pattern.permute.xlu0 0
      %476 = vperm.xlu0 %475, %v326
      %v477 = vpop.permute.xlu0 %476
      %v479 = vadd.f32 %v451, %v462
      %v480 = vadd.f32 %v452, %v462
      %v481 = vadd.f32 %v453, %v467
      %v482 = vadd.f32 %v454, %v467
      %v483 = vadd.f32 %v455, %v472
      %v484 = vadd.f32 %v456, %v472
      %v485 = vadd.f32 %v457, %v477
      %v486 = vadd.f32 %v458, %v477
      %v487 = vadd.f32 %v479, %v351
      %v488 = vadd.f32 %v480, %v352
      %v489 = vadd.f32 %v481, %v353
      %v490 = vadd.f32 %v482, %v354
      %v491 = vadd.f32 %v483, %v355
      %v492 = vadd.f32 %v484, %v356
      %v493 = vadd.f32 %v485, %v357
      %v494 = vadd.f32 %v486, %v358
      %v495 = vadd.f32 %v487, %v489
      %v496 = vadd.f32 %v495, %v491
      %v497 = vadd.f32 %v496, %v493
      %v498 = vrot.slane %v497, 4
      %v499 = vadd.f32 %v497, %v498
      %v500 = vrot.slane %v499, 2
      %v501 = vadd.f32 %v499, %v500
      %v502 = vrot.slane %v501, 1
      %v503 = vadd.f32 %v501, %v502
      %v504 = vadd.f32 %v488, %v490
      %v505 = vadd.f32 %v504, %v492
      %v506 = vadd.f32 %v505, %v494
      %v507 = vrot.slane %v506, 4
      %v508 = vadd.f32 %v506, %v507
      %v509 = vrot.slane %v508, 2
      %v510 = vadd.f32 %v508, %v509
      %v511 = vrot.slane %v510, 1
      %v512 = vadd.f32 %v510, %v511
      %v513 = vmul.f32 %v503, 0.03125
      %v514 = vmul.f32 %v512, 0.03125
      %v515 = vmul.f32 %v487, %v487
      %v516 = vmul.f32 %v488, %v488
      %v517 = vmul.f32 %v489, %v489
      %v518 = vmul.f32 %v490, %v490
      %v519 = vmul.f32 %v491, %v491
      %v520 = vmul.f32 %v492, %v492
      %v521 = vmul.f32 %v493, %v493
      %v522 = vmul.f32 %v494, %v494
      %v523 = vadd.f32 %v515, %v517
      %v524 = vadd.f32 %v523, %v519
      %v525 = vadd.f32 %v524, %v521
      %v526 = vrot.slane %v525, 4
      %v527 = vadd.f32 %v525, %v526
      %v528 = vrot.slane %v527, 2
      %v529 = vadd.f32 %v527, %v528
      %v530 = vrot.slane %v529, 1
      %v531 = vadd.f32 %v529, %v530
      %v532 = vadd.f32 %v516, %v518
      %v533 = vadd.f32 %v532, %v520
      %v534 = vadd.f32 %v533, %v522
      %v535 = vrot.slane %v534, 4
      %v536 = vadd.f32 %v534, %v535
      %v537 = vrot.slane %v536, 2
      %v538 = vadd.f32 %v536, %v537
      %v539 = vrot.slane %v538, 1
      %v540 = vadd.f32 %v538, %v539
      %v541 = vmul.f32 %v531, 0.03125
      %v542 = vmul.f32 %v540, 0.03125
      %v543 = vmul.f32 %v513, %v513
      %v544 = vmul.f32 %v514, %v514
      %v545 = vsub.f32 %v541, %v543
      %v546 = vsub.f32 %v542, %v544
      %v547 = vsub.f32 %v487, %v513
      %v548 = vsub.f32 %v488, %v514
      %v549 = vsub.f32 %v489, %v513
      %v550 = vsub.f32 %v490, %v514
      %v551 = vsub.f32 %v491, %v513
      %v552 = vsub.f32 %v492, %v514
      %v553 = vsub.f32 %v493, %v513
      %v554 = vsub.f32 %v494, %v514
      %v555 = vadd.f32 %v545, 1e-05
      %v556 = vadd.f32 %v546, 1e-05
      %v557 = vrsqrt.pop %v555
      %v558 = vrsqrt.pop %v556
      %v559 = vmul.f32 %v547, %v557
      %v560 = vmul.f32 %v548, %v558
      %v561 = vmul.f32 %v549, %v557
      %v562 = vmul.f32 %v550, %v558
      %v563 = vmul.f32 %v551, %v557
      %v564 = vmul.f32 %v552, %v558
      %v565 = vmul.f32 %v553, %v557
      %v566 = vmul.f32 %v554, %v558
      %v567 = vpack.c.bf16 %v561, %v559
      %v568 = vpack.c.bf16 %v562, %v560
      %v569 = vpack.c.bf16 %v565, %v563
      %v570 = vpack.c.bf16 %v566, %v564
      %572 = vset.pattern.permute.xlu0 0
      %573 = vperm.xlu0 %572, %v335
      %v574 = vpop.permute.xlu0 %573
      %577 = vset.pattern.permute.xlu0 0
      %578 = vperm.xlu0 %577, %v336
      %v579 = vpop.permute.xlu0 %578
      %582 = vset.pattern.permute.xlu0 0
      %583 = vperm.xlu0 %582, %v337
      %v584 = vpop.permute.xlu0 %583
      %587 = vset.pattern.permute.xlu0 0
      %588 = vperm.xlu0 %587, %v338
      %v589 = vpop.permute.xlu0 %588
      %592 = vset.pattern.permute.xlu0 0
      %593 = vperm.xlu0 %592, %v339
      %v594 = vpop.permute.xlu0 %593
      %597 = vset.pattern.permute.xlu0 0
      %598 = vperm.xlu0 %597, %v340
      %v599 = vpop.permute.xlu0 %598
      %602 = vset.pattern.permute.xlu0 0
      %603 = vperm.xlu0 %602, %v341
      %v604 = vpop.permute.xlu0 %603
      %607 = vset.pattern.permute.xlu0 0
      %608 = vperm.xlu0 %607, %v342
      %v609 = vpop.permute.xlu0 %608
      %v619 = vunpack.c.l.b16 %v327
      %v620 = vunpack.c.l.b16 %v328
      %v621 = vunpack.c.l.b16 %v329
      %v622 = vunpack.c.l.b16 %v330
      %v623 = vunpack.c.l.b16 %v331
      %v624 = vunpack.c.l.b16 %v332
      %v625 = vunpack.c.l.b16 %v333
      %v626 = vunpack.c.l.b16 %v334
      %v627 = vpack.c.b16 %v620, %v619
      %v628 = vpack.c.b16 %v622, %v621
      %v629 = vpack.c.b16 %v624, %v623
      %v630 = vpack.c.b16 %v626, %v625
      %vm631 = vcmask 261120
      %v633 = vsel %vm631, %v627, 0
      %v636 = vsel %vm631, %v628, 0
      %v639 = vsel %vm631, %v629, 0
      %v642 = vsel %vm631, %v630, 0
      %644 = vmatprep.subr.bf16.mxu0 %v568
      %645 = vmatpush1.bf16.msra.mxu0 %v567
      %646 = vmatprep.subr.bf16.mxu0 %v570
      %647 = vmatpush1.bf16.msra.mxu0 %v569
      %648 = vmatprep.subr.bf16.mxu0 0
      %649 = vmatpush1.bf16.msra.mxu0 0
      %650 = vmatprep.subr.bf16.mxu0 0
      %651 = vmatpush1.bf16.msra.mxu0 0
      %652 = vmatprep.subr.bf16.mxu0 0
      %653 = vmatpush1.bf16.msra.mxu0 0
      %654 = vmatprep.subr.bf16.mxu0 0
      %655 = vmatpush1.bf16.msra.mxu0 0
      %656 = vmatprep.subr.bf16.mxu0 0
      %657 = vmatpush1.bf16.msra.mxu0 0
      %658 = vmatprep.subr.bf16.mxu0 0
      %659 = vmatpush1.bf16.msra.mxu0 0
      %660 = vmatprep.subr.bf16.mxu0 0
      %661 = vmatpush1.bf16.msra.mxu0 0
      %662 = vmatprep.subr.bf16.mxu0 0
      %663 = vmatpush1.bf16.msra.mxu0 0
      %664 = vmatprep.subr.bf16.mxu0 0
      %665 = vmatpush1.bf16.msra.mxu0 0
      %666 = vmatprep.subr.bf16.mxu0 0
      %667 = vmatpush1.bf16.msra.mxu0 0
      %668 = vmatprep.subr.bf16.mxu0 0
      %669 = vmatpush1.bf16.msra.mxu0 0
      %670 = vmatprep.subr.bf16.mxu0 0
      %671 = vmatpush1.bf16.msra.mxu0 0
      %672 = vmatprep.subr.bf16.mxu0 0
      %673 = vmatpush1.bf16.msra.mxu0 0
      %674 = vmatprep.subr.bf16.mxu0 0
      %675 = vmatpush1.bf16.msra.mxu0 0
      %676 = vmatprep.mubr.bf16.mxu0 0
      %677 = vmatmul.mubr.bf16.gmra.mrb[0].mxu0 %v633
      %v678 = vpop.f32.mrb[0].mxu0
      %v679 = vadd.f32 %v574, %v678
      %v680 = vpop.f32.mrb[0].mxu0
      %v681 = vadd.f32 %v574, %v680
      %v682 = vpop.f32.mrb[0].mxu0
      %v683 = vadd.f32 %v579, %v682
      %v684 = vpop.f32.mrb[0].mxu0
      %v685 = vadd.f32 %v579, %v684
      %686 = vmatprep.mubr.bf16.mxu0 0
      %687 = vmatmul.mubr.bf16.gmra.mrb[0].mxu0 %v636
      %v688 = vpop.f32.mrb[0].mxu0
      %v689 = vadd.f32 %v584, %v688
      %v690 = vpop.f32.mrb[0].mxu0
      %v691 = vadd.f32 %v584, %v690
      %v692 = vpop.f32.mrb[0].mxu0
      %v693 = vadd.f32 %v589, %v692
      %v694 = vpop.f32.mrb[0].mxu0
      %v695 = vadd.f32 %v589, %v694
      %696 = vmatprep.mubr.bf16.mxu0 0
      %697 = vmatmul.mubr.bf16.gmra.mrb[0].mxu0 %v639
      %v698 = vpop.f32.mrb[0].mxu0
      %v699 = vadd.f32 %v594, %v698
      %v700 = vpop.f32.mrb[0].mxu0
      %v701 = vadd.f32 %v594, %v700
      %v702 = vpop.f32.mrb[0].mxu0
      %v703 = vadd.f32 %v599, %v702
      %v704 = vpop.f32.mrb[0].mxu0
      %v705 = vadd.f32 %v599, %v704
      %706 = vmatprep.mubr.bf16.mxu0 0
      %707 = vmatmul.mubr.bf16.gmra.mrb[0].mxu0 %v642
      %v708 = vpop.f32.mrb[0].mxu0
      %v709 = vadd.f32 %v604, %v708
      %v710 = vpop.f32.mrb[0].mxu0
      %v711 = vadd.f32 %v604, %v710
      %v712 = vpop.f32.mrb[0].mxu0
      %v713 = vadd.f32 %v609, %v712
      %v714 = vpop.f32.mrb[0].mxu0
      %v715 = vadd.f32 %v609, %v714
      %716 = vdwg.mxu0
      %v717 = vmul.f32 %v679, 0.5
      %v718 = vmul.f32 %v681, 0.5
      %v719 = vmul.f32 %v683, 0.5
      %v720 = vmul.f32 %v685, 0.5
      %v721 = vmul.f32 %v689, 0.5
      %v722 = vmul.f32 %v691, 0.5
      %v723 = vmul.f32 %v693, 0.5
      %v724 = vmul.f32 %v695, 0.5
      %v725 = vmul.f32 %v699, 0.5
      %v726 = vmul.f32 %v701, 0.5
      %v727 = vmul.f32 %v703, 0.5
      %v728 = vmul.f32 %v705, 0.5
      %v729 = vmul.f32 %v709, 0.5
      %v730 = vmul.f32 %v711, 0.5
      %v731 = vmul.f32 %v713, 0.5
      %v732 = vmul.f32 %v715, 0.5
      %v733 = vmul.f32 %v679, 0.044715
      %v734 = vmul.f32 %v681, 0.044715
      %v735 = vmul.f32 %v683, 0.044715
      %v736 = vmul.f32 %v685, 0.044715
      %v737 = vmul.f32 %v689, 0.044715
      %v738 = vmul.f32 %v691, 0.044715
      %v739 = vmul.f32 %v693, 0.044715
      %v740 = vmul.f32 %v695, 0.044715
      %v741 = vmul.f32 %v699, 0.044715
      %v742 = vmul.f32 %v701, 0.044715
      %v743 = vmul.f32 %v703, 0.044715
      %v744 = vmul.f32 %v705, 0.044715
      %v745 = vmul.f32 %v709, 0.044715
      %v746 = vmul.f32 %v711, 0.044715
      %v747 = vmul.f32 %v713, 0.044715
      %v748 = vmul.f32 %v715, 0.044715
      %v749 = vmul.f32 %v733, %v679
      %v750 = vmul.f32 %v734, %v681
      %v751 = vmul.f32 %v735, %v683
      %v752 = vmul.f32 %v736, %v685
      %v753 = vmul.f32 %v737, %v689
      %v754 = vmul.f32 %v738, %v691
      %v755 = vmul.f32 %v739, %v693
      %v756 = vmul.f32 %v740, %v695
      %v757 = vmul.f32 %v741, %v699
      %v758 = vmul.f32 %v742, %v701
      %v759 = vmul.f32 %v743, %v703
      %v760 = vmul.f32 %v744, %v705
      %v761 = vmul.f32 %v745, %v709
      %v762 = vmul.f32 %v746, %v711
      %v763 = vmul.f32 %v747, %v713
      %v764 = vmul.f32 %v748, %v715
      %v765 = vmul.f32 %v749, %v679
      %v766 = vmul.f32 %v750, %v681
      %v767 = vmul.f32 %v751, %v683
      %v768 = vmul.f32 %v752, %v685
      %v769 = vmul.f32 %v753, %v689
      %v770 = vmul.f32 %v754, %v691
      %v771 = vmul.f32 %v755, %v693
      %v772 = vmul.f32 %v756, %v695
      %v773 = vmul.f32 %v757, %v699
      %v774 = vmul.f32 %v758, %v701
      %v775 = vmul.f32 %v759, %v703
      %v776 = vmul.f32 %v760, %v705
      %v777 = vmul.f32 %v761, %v709
      %v778 = vmul.f32 %v762, %v711
      %v779 = vmul.f32 %v763, %v713
      %v780 = vmul.f32 %v764, %v715
      %v781 = vadd.f32 %v679, %v765
      %v782 = vadd.f32 %v681, %v766
      %v783 = vadd.f32 %v683, %v767
      %v784 = vadd.f32 %v685, %v768
      %v785 = vadd.f32 %v689, %v769
      %v786 = vadd.f32 %v691, %v770
      %v787 = vadd.f32 %v693, %v771
      %v788 = vadd.f32 %v695, %v772
      %v789 = vadd.f32 %v699, %v773
      %v790 = vadd.f32 %v701, %v774
      %v791 = vadd.f32 %v703, %v775
      %v792 = vadd.f32 %v705, %v776
      %v793 = vadd.f32 %v709, %v777
      %v794 = vadd.f32 %v711, %v778
      %v795 = vadd.f32 %v713, %v779
      %v796 = vadd.f32 %v715, %v780
      %v797 = vmul.f32 %v781, 0.7978846
      %v798 = vmul.f32 %v782, 0.7978846
      %v799 = vmul.f32 %v783, 0.7978846
      %v800 = vmul.f32 %v784, 0.7978846
      %v801 = vmul.f32 %v785, 0.7978846
      %v802 = vmul.f32 %v786, 0.7978846
      %v803 = vmul.f32 %v787, 0.7978846
      %v804 = vmul.f32 %v788, 0.7978846
      %v805 = vmul.f32 %v789, 0.7978846
      %v806 = vmul.f32 %v790, 0.7978846
      %v807 = vmul.f32 %v791, 0.7978846
      %v808 = vmul.f32 %v792, 0.7978846
      %v809 = vmul.f32 %v793, 0.7978846
      %v810 = vmul.f32 %v794, 0.7978846
      %v811 = vmul.f32 %v795, 0.7978846
      %v812 = vmul.f32 %v796, 0.7978846
      %v813 = vtanh.pop %v797
      %v814 = vtanh.pop %v798
      %v815 = vtanh.pop %v799
      %v816 = vtanh.pop %v800
      %v817 = vtanh.pop %v801
      %v818 = vtanh.pop %v802
      %v819 = vtanh.pop %v803
      %v820 = vtanh.pop %v804
      %v821 = vtanh.pop %v805
      %v822 = vtanh.pop %v806
      %v823 = vtanh.pop %v807
      %v824 = vtanh.pop %v808
      %v825 = vtanh.pop %v809
      %v826 = vtanh.pop %v810
      %v827 = vtanh.pop %v811
      %v828 = vtanh.pop %v812
      %v829 = vadd.f32 %v813, 1.0
      %v830 = vadd.f32 %v814, 1.0
      %v831 = vadd.f32 %v815, 1.0
      %v832 = vadd.f32 %v816, 1.0
      %v833 = vadd.f32 %v817, 1.0
      %v834 = vadd.f32 %v818, 1.0
      %v835 = vadd.f32 %v819, 1.0
      %v836 = vadd.f32 %v820, 1.0
      %v837 = vadd.f32 %v821, 1.0
      %v838 = vadd.f32 %v822, 1.0
      %v839 = vadd.f32 %v823, 1.0
      %v840 = vadd.f32 %v824, 1.0
      %v841 = vadd.f32 %v825, 1.0
      %v842 = vadd.f32 %v826, 1.0
      %v843 = vadd.f32 %v827, 1.0
      %v844 = vadd.f32 %v828, 1.0
      %v845 = vmul.f32 %v717, %v829
      %v846 = vmul.f32 %v718, %v830
      %v847 = vmul.f32 %v719, %v831
      %v848 = vmul.f32 %v720, %v832
      %v849 = vmul.f32 %v721, %v833
      %v850 = vmul.f32 %v722, %v834
      %v851 = vmul.f32 %v723, %v835
      %v852 = vmul.f32 %v724, %v836
      %v853 = vmul.f32 %v725, %v837
      %v854 = vmul.f32 %v726, %v838
      %v855 = vmul.f32 %v727, %v839
      %v856 = vmul.f32 %v728, %v840
      %v857 = vmul.f32 %v729, %v841
      %v858 = vmul.f32 %v730, %v842
      %v859 = vmul.f32 %v731, %v843
      %v860 = vmul.f32 %v732, %v844
      %v861 = vpack.c.bf16 %v847, %v845
      %v862 = vpack.c.bf16 %v848, %v846
      %v863 = vpack.c.bf16 %v851, %v849
      %v864 = vpack.c.bf16 %v852, %v850
      %v865 = vpack.c.bf16 %v855, %v853
      %v866 = vpack.c.bf16 %v856, %v854
      %v867 = vpack.c.bf16 %v859, %v857
      %v868 = vpack.c.bf16 %v860, %v858
      %870 = vset.pattern.permute.xlu0 0
      %871 = vperm.xlu0 %870, %v347
      %v872 = vpop.permute.xlu0 %871
      %875 = vset.pattern.permute.xlu0 0
      %876 = vperm.xlu0 %875, %v348
      %v877 = vpop.permute.xlu0 %876
      %880 = vset.pattern.permute.xlu0 0
      %881 = vperm.xlu0 %880, %v349
      %v882 = vpop.permute.xlu0 %881
      %885 = vset.pattern.permute.xlu0 0
      %886 = vperm.xlu0 %885, %v350
      %v887 = vpop.permute.xlu0 %886
      %v893 = vunpack.c.l.b16 %v343
      %v894 = vunpack.c.l.b16 %v344
      %v895 = vunpack.c.l.b16 %v345
      %v896 = vunpack.c.l.b16 %v346
      %v897 = vpack.c.b16 %v894, %v893
      %v898 = vpack.c.b16 %v896, %v895
      %vm899 = vcmask 523264
      %v901 = vsel %vm899, %v897, 0
      %v904 = vsel %vm899, %v898, 0
      %906 = vmatprep.subr.bf16.mxu0 %v862
      %907 = vmatpush1.bf16.msra.mxu0 %v861
      %908 = vmatprep.subr.bf16.mxu0 %v864
      %909 = vmatpush1.bf16.msra.mxu0 %v863
      %910 = vmatprep.subr.bf16.mxu0 %v866
      %911 = vmatpush1.bf16.msra.mxu0 %v865
      %912 = vmatprep.subr.bf16.mxu0 %v868
      %913 = vmatpush1.bf16.msra.mxu0 %v867
      %914 = vmatprep.subr.bf16.mxu0 0
      %915 = vmatpush1.bf16.msra.mxu0 0
      %916 = vmatprep.subr.bf16.mxu0 0
      %917 = vmatpush1.bf16.msra.mxu0 0
      %918 = vmatprep.subr.bf16.mxu0 0
      %919 = vmatpush1.bf16.msra.mxu0 0
      %920 = vmatprep.subr.bf16.mxu0 0
      %921 = vmatpush1.bf16.msra.mxu0 0
      %922 = vmatprep.subr.bf16.mxu0 0
      %923 = vmatpush1.bf16.msra.mxu0 0
      %924 = vmatprep.subr.bf16.mxu0 0
      %925 = vmatpush1.bf16.msra.mxu0 0
      %926 = vmatprep.subr.bf16.mxu0 0
      %927 = vmatpush1.bf16.msra.mxu0 0
      %928 = vmatprep.subr.bf16.mxu0 0
      %929 = vmatpush1.bf16.msra.mxu0 0
      %930 = vmatprep.subr.bf16.mxu0 0
      %931 = vmatpush1.bf16.msra.mxu0 0
      %932 = vmatprep.subr.bf16.mxu0 0
      %933 = vmatpush1.bf16.msra.mxu0 0
      %934 = vmatprep.subr.bf16.mxu0 0
      %935 = vmatpush1.bf16.msra.mxu0 0
      %936 = vmatprep.subr.bf16.mxu0 0
      %937 = vmatpush1.bf16.msra.mxu0 0
      %938 = vmatprep.mubr.bf16.mxu0 0
      %939 = vmatmul.mubr.bf16.gmra.mrb[0].mxu0 %v901
      %v940 = vpop.f32.mrb[0].mxu0
      %v941 = vadd.f32 %v872, %v940
      %v942 = vpop.f32.mrb[0].mxu0
      %v943 = vadd.f32 %v872, %v942
      %v944 = vpop.f32.mrb[0].mxu0
      %v945 = vadd.f32 %v877, %v944
      %v946 = vpop.f32.mrb[0].mxu0
      %v947 = vadd.f32 %v877, %v946
      %948 = vmatprep.mubr.bf16.mxu0 0
      %949 = vmatmul.mubr.bf16.gmra.mrb[0].mxu0 %v904
      %v950 = vpop.f32.mrb[0].mxu0
      %v951 = vadd.f32 %v882, %v950
      %v952 = vpop.f32.mrb[0].mxu0
      %v953 = vadd.f32 %v882, %v952
      %v954 = vpop.f32.mrb[0].mxu0
      %v955 = vadd.f32 %v887, %v954
      %v956 = vpop.f32.mrb[0].mxu0
      %v957 = vadd.f32 %v887, %v956
      %958 = vdwg.mxu0
      %959 = vst [vmem:[%s316] sm:$0xff] %v941
      %960 = vst [vmem:[%s316 + $0x8] sm:$0xff] %v943
      %961 = vst [vmem:[%s316 + $0x10] sm:$0xff] %v945
      %962 = vst [vmem:[%s316 + $0x18] sm:$0xff] %v947
      %963 = vst [vmem:[%s316 + $0x20] sm:$0xff] %v951
      %964 = vst [vmem:[%s316 + $0x28] sm:$0xff] %v953
      %965 = vst [vmem:[%s316 + $0x30] sm:$0xff] %v955
      %966 = vst [vmem:[%s316 + $0x38] sm:$0xff] %v957
      %s967 = smul.u32 2, %s23
      %p968 = scmp.lt.s32.totalorder %s22, 1
      %s969 = scalar_select %p968, %s22, 1
      %p970 = scmp.lt.s32.totalorder %s967, 1
      %s971 = scalar_select %p970, %s967, 1
      %s972 = smul.addr %s969, 8
      %s973 = sadd.s32 %s971, %s972
      %s974 = smul.addr %s973, 8
      %s975 = scalar_lea.vmem %s7, %s974
      // Predicated region
      $region49: #{_forward.1} parent=47 // pred_check
        %p976 = pneg %p204
      $region50: #{_forward.1} parent=47 // pred_check_branch
        %978 = sbr.rel (%p976) target = $region52
      $region51: #{_forward.1} parent=47 // pred_region
        %s979 = smul.u32 2, %s23
      $region52: #{_forward.1} parent=47 // pred_fallthru
        _
    $region48: #{_forward.1} parent=5 // pred_fallthru
      _
    %p980 = scmp.le.s32.totalorder 2, %s13
    // Predicated region
    $region53: #{_forward.1} parent=5 // pred_check
      %p981 = pneg %p980
    $region54: #{_forward.1} parent=5 // pred_check_branch
      %983 = sbr.rel (%p981) target = $region56
    $region55: #{_forward.1} parent=5 // pred_region
      %s984 = ssub.s32 %s13, 2
      // Predicated region
      $region57: #{_forward.1} parent=55 // pred_check
        %p985 = pneg %p210
      $region58: #{_forward.1} parent=55 // pred_check_branch
        %987 = sbr.rel (%p985) target = $region60
      $region59: #{_forward.1} parent=55 // pred_region
        %s988 = smul.u32 2, %s25
        %p989 = scmp.lt.s32.totalorder %s24, 1
        %s990 = scalar_select %p989, %s24, 1
        %p991 = scmp.lt.s32.totalorder %s988, 1
        %s992 = scalar_select %p991, %s988, 1
        %s993 = smul.addr %s990, 8
        %s994 = sadd.s32 %s992, %s993
        %s995 = smul.addr %s994, 8
        %s996 = scalar_lea.vmem %s7, %s995
      $region60: #{_forward.1} parent=55 // pred_fallthru
        _
    $region56: #{_forward.1} parent=5 // pred_fallthru
      _
  $region6: #{_forward.1} parent=0 // loop_footer
    %s17 = sadd.s32 1, %s13
  $region7: #{_forward.1} parent=0 // loop_footer_branch
    %12 = sbr.rel target = $region3
  $region8: #{_forward.1} parent=0 // loop_exit
    _

</llo_original>
